<compile_context>
chip_gen: v5e
topology: v5e:2x2
jax: 0.10.0
libtpu: 0.0.40
codegen_flags: <defaults>
</compile_context>

<pallas_src>
import functools
import math

import jax
import jax.numpy as jnp
from jax.experimental import pallas as pl
from jax.experimental.pallas import tpu as pltpu


def _round_up(x, m):
    return ((x + m - 1) // m) * m


def _label_smoothing_kernel(x_ref, tgt_ref, out_ref, acc_ref, *, n_rows,
                            padding_idx, smooth_val, confidence,
                            log_smooth, log_conf):
    i = pl.program_id(0)

    @pl.when(i == 0)
    def _():
        acc_ref[...] = jnp.zeros_like(acc_ref)

    x = x_ref[...].astype(jnp.float32)      # (TM, V) log-probs, upcast in-kernel
    tgt = tgt_ref[...]                      # (TM, 1) int32 labels
    tm, v = x.shape

    cols = jax.lax.broadcasted_iota(jnp.int32, (tm, v), 1)
    row_ids = i * tm + jax.lax.broadcasted_iota(jnp.int32, (tm, 1), 0)

    # true_dist only takes values {confidence, smooth_val, 0}; the logs are
    # compile-time constants, so no transcendental is evaluated in-kernel.
    is_tgt = cols == tgt
    contrib = jnp.where(
        is_tgt,
        jnp.float32(confidence) * (jnp.float32(log_conf) - x),
        jnp.float32(smooth_val) * (jnp.float32(log_smooth) - x),
    )
    # true_dist[:, padding_idx] = 0
    contrib = jnp.where(cols == padding_idx, jnp.float32(0.0), contrib)
    # zero rows whose target is padding_idx, and rows past N (partial last block)
    row_valid = (tgt != padding_idx) & (row_ids < n_rows)   # (TM, 1)
    contrib = jnp.where(row_valid, contrib, jnp.float32(0.0))

    # Fold the TM rows down to 8 sublane-groups with pure VPU adds and
    # accumulate; the cross-lane reduce happens once, at the end.
    acc_ref[...] += jnp.sum(contrib.reshape(tm // 8, 8, v), axis=0)

    @pl.when(i == pl.num_programs(0) - 1)
    def _():
        out_ref[0, 0] = jnp.sum(acc_ref[...])


def label_smoothing_loss(x, target, *, size, padding_idx, smoothing,
                         tile_rows=None, vmem_limit_bytes=48 * 1024 * 1024):
    """x: (N, size) float log-probs (f32/bf16); target: (N,) ints. Scalar loss."""
    assert x.ndim == 2 and x.shape[1] == size
    assert size > 2, "smoothing / (size - 2) requires size > 2"
    n, v = x.shape

    confidence = 1.0 - smoothing
    smooth_val = smoothing / (size - 2)
    # Guarded constant folding of the logs (0 * log(0) contributes 0).
    log_conf = math.log(confidence) if confidence > 0.0 else 0.0
    log_smooth = math.log(smooth_val) if smooth_val > 0.0 else 0.0

    itemsize = jnp.dtype(x.dtype).itemsize
    if tile_rows is None:
        # ~8 MiB of x per block (double-buffered ~16 MiB), capped at 1024 rows.
        tile_rows = (8 * 1024 * 1024) // max(1, v * itemsize)
        tile_rows = min(1024, tile_rows)
    # Keep the sublane dim a multiple of 32 (covers f32/bf16/int8 tiling).
    tile_rows = max(32, (int(tile_rows) // 32) * 32)
    tile_rows = min(tile_rows, _round_up(n, 32))
    grid = pl.cdiv(n, tile_rows)

    tgt2d = target.astype(jnp.int32).reshape(n, 1)

    kernel = functools.partial(
        _label_smoothing_kernel,
        n_rows=n,
        padding_idx=padding_idx,
        smooth_val=smooth_val,
        confidence=confidence,
        log_smooth=log_smooth,
        log_conf=log_conf,
    )

    out = pl.pallas_call(
        kernel,
        out_shape=jax.ShapeDtypeStruct((1, 1), jnp.float32),
        grid_spec=pltpu.PrefetchScalarGridSpec(
            num_scalar_prefetch=0,
            grid=(grid,),
            in_specs=[
                pl.BlockSpec((tile_rows, v), lambda i: (i, 0)),
                pl.BlockSpec((tile_rows, 1), lambda i: (i, 0)),
            ],
            out_specs=pl.BlockSpec((1, 1), lambda i: (0, 0),
                                   memory_space=pltpu.SMEM),
            scratch_shapes=[pltpu.VMEM((8, v), jnp.float32)],
        ),
        compiler_params=pltpu.CompilerParams(
            dimension_semantics=("arbitrary",),
            vmem_limit_bytes=vmem_limit_bytes,
        ),
    )(x, tgt2d)
    return out[0, 0]


def _reference_loss(x, target, *, size, padding_idx, smoothing):
    """Pure-JAX reference mirroring the PyTorch module."""
    confidence = 1.0 - smoothing
    n = x.shape[0]
    cols = jnp.arange(size)[None, :]
    tgt = target[:, None]
    true_dist = jnp.full((n, size), smoothing / (size - 2), jnp.float32)
    true_dist = jnp.where(cols == tgt, confidence, true_dist)
    true_dist = jnp.where(cols == padding_idx, 0.0, true_dist)
    true_dist = jnp.where(tgt != padding_idx, true_dist, 0.0)
    contrib = jnp.where(true_dist > 0.0,
                        true_dist * (jnp.log(true_dist) - x), 0.0)
    return jnp.sum(contrib)


if __name__ == "__main__":
    SIZE = 128          # vocab size (x.size(1))
    N = 200             # number of (batch * seq) rows; NOT a multiple of 64
    PADDING_IDX = 0
    SMOOTHING = 0.1

    key = jax.random.PRNGKey(0)
    kx, kt = jax.random.split(key)

    # Deterministic log-probability inputs (log_softmax of random logits).
    logits = jax.random.normal(kx, (N, SIZE), dtype=jnp.float32)
    x = jax.nn.log_softmax(logits, axis=-1)

    # Targets include padding tokens to exercise the row-masking path.
    target = jax.random.randint(kt, (N,), 0, SIZE, dtype=jnp.int32)
    target = target.at[3].set(PADDING_IDX).at[11].set(PADDING_IDX)
    target = target.at[N - 1].set(PADDING_IDX)

    # f32 path with an explicit small block so the grid has several steps and a
    # partial (row-masked) last block.
    loss = label_smoothing_loss(
        x, target, size=SIZE, padding_idx=PADDING_IDX, smoothing=SMOOTHING,
        tile_rows=64,
    )
    loss = jax.block_until_ready(loss)
    ref = _reference_loss(
        x, target, size=SIZE, padding_idx=PADDING_IDX, smoothing=SMOOTHING)
    assert jnp.allclose(loss, ref, rtol=1e-5, atol=1e-3), (loss, ref)

    # bf16 path: x streamed as bf16 (half the HBM traffic), upcast in-kernel.
    x_bf16 = x.astype(jnp.bfloat16)
    loss_bf16 = label_smoothing_loss(
        x_bf16, target, size=SIZE, padding_idx=PADDING_IDX, smoothing=SMOOTHING,
    )
    loss_bf16 = jax.block_until_ready(loss_bf16)
    ref_bf16 = _reference_loss(
        x_bf16.astype(jnp.float32), target, size=SIZE,
        padding_idx=PADDING_IDX, smoothing=SMOOTHING)
    assert jnp.allclose(loss_bf16, ref_bf16, rtol=1e-4, atol=1e-2), (
        loss_bf16, ref_bf16)

    print("KERNEL_OK")
</pallas_src>

<mosaic_0001>
module attributes {stable_mosaic.version = 11 : i64} {
  func.func @_label_smoothing_kernel(%arg0: i32, %arg1: memref<64x128xf32, #tpu.memory_space<vmem>>, %arg2: memref<64x1xi32, #tpu.memory_space<vmem>>, %arg3: memref<1x1xf32, #tpu.memory_space<smem>>, %arg4: memref<8x128xf32, #tpu.memory_space<vmem>>) attributes {dimension_semantics = [#tpu.dimension_semantics<arbitrary>], iteration_bounds = array<i64: 4>, scalar_prefetch = 0 : i64, scratch_operands = 1 : i64, tpu.core_type = #tpu.core_type<tc>, window_params = [{transform_indices = @transform_0, window_bounds = array<i64: 64, 128>}, {transform_indices = @transform_1, window_bounds = array<i64: 64, 1>}, {transform_indices = @transform_2, window_bounds = array<i64: 1, 1>}]} {
    %c0_i32 = arith.constant 0 : i32
    %0 = arith.cmpi eq, %arg0, %c0_i32 : i32
    %1 = arith.extui %0 : i1 to i32
    %c0_i32_0 = arith.constant 0 : i32
    %2 = arith.cmpi ne, %1, %c0_i32_0 : i32
    scf.if %2 {
      %cst_17 = arith.constant 0.000000e+00 : f32
      %42 = vector.broadcast %cst_17 : f32 to vector<8x128xf32>
      %c0_18 = arith.constant 0 : index
      %c0_19 = arith.constant 0 : index
      %43 = vector.load %arg4[%c0_18, %c0_19] : memref<8x128xf32, #tpu.memory_space<vmem>>, vector<8x128xf32>
      tpu.vector_store %arg4[%c0_18, %c0_19], %42 {strides = array<i32>} : memref<8x128xf32, #tpu.memory_space<vmem>>, vector<8x128xf32>,
    } else {
    }
    %c0 = arith.constant 0 : index
    %c0_1 = arith.constant 0 : index
    %3 = vector.load %arg1[%c0, %c0_1] : memref<64x128xf32, #tpu.memory_space<vmem>>, vector<64x128xf32>
    %c0_2 = arith.constant 0 : index
    %c0_3 = arith.constant 0 : index
    %4 = vector.load %arg2[%c0_2, %c0_3] : memref<64x1xi32, #tpu.memory_space<vmem>>, vector<64x1xi32>
    %5 = tpu.iota {dimensions = array<i32: 1>} : vector<64x128xi32>
    %c64_i32 = arith.constant 64 : i32
    %6 = arith.muli %arg0, %c64_i32 : i32
    %7 = tpu.iota {dimensions = array<i32: 0>} : vector<64x1xi32>
    %8 = vector.broadcast %6 : i32 to vector<64x1xi32>
    %9 = arith.addi %8, %7 : vector<64x1xi32>
    %10 = vector.broadcast %4 : vector<64x1xi32> to vector<64x128xi32>
    %11 = arith.cmpi eq, %5, %10 : vector<64x128xi32>
    %cst = arith.constant -0.105360515 : f32
    %12 = vector.broadcast %cst : f32 to vector<64x128xf32>
    %13 = arith.subf %12, %3 : vector<64x128xf32>
    %cst_4 = arith.constant 0.899999976 : f32
    %14 = vector.broadcast %cst_4 : f32 to vector<64x128xf32>
    %15 = arith.mulf %14, %13 : vector<64x128xf32>
    %cst_5 = arith.constant -7.1388669 : f32
    %16 = vector.broadcast %cst_5 : f32 to vector<64x128xf32>
    %17 = arith.subf %16, %3 : vector<64x128xf32>
    %cst_6 = arith.constant 7.93650805E-4 : f32
    %18 = vector.broadcast %cst_6 : f32 to vector<64x128xf32>
    %19 = arith.mulf %18, %17 : vector<64x128xf32>
    %20 = arith.select %11, %15, %19 : vector<64x128xi1>, vector<64x128xf32>
    %c0_i32_7 = arith.constant 0 : i32
    %21 = vector.broadcast %c0_i32_7 : i32 to vector<64x128xi32>
    %22 = arith.cmpi eq, %5, %21 : vector<64x128xi32>
    %cst_8 = arith.constant 0.000000e+00 : f32
    %23 = vector.broadcast %cst_8 : f32 to vector<64x128xf32>
    %24 = arith.select %22, %23, %20 : vector<64x128xi1>, vector<64x128xf32>
    %c0_i32_9 = arith.constant 0 : i32
    %25 = vector.broadcast %c0_i32_9 : i32 to vector<64x1xi32>
    %26 = arith.cmpi ne, %4, %25 : vector<64x1xi32>
    %c200_i32 = arith.constant 200 : i32
    %27 = vector.broadcast %c200_i32 : i32 to vector<64x1xi32>
    %28 = arith.cmpi slt, %9, %27 : vector<64x1xi32>
    %29 = arith.andi %26, %28 : vector<64x1xi1>
    %cst_10 = arith.constant 0.000000e+00 : f32
    %30 = vector.shape_cast %29 : vector<64x1xi1> to vector<64x1xi1>
    %31 = vector.broadcast %30 : vector<64x1xi1> to vector<64x128xi1>
    %32 = vector.broadcast %cst_10 : f32 to vector<64x128xf32>
    %33 = arith.select %31, %24, %32 : vector<64x128xi1>, vector<64x128xf32>
    %c0_11 = arith.constant 0 : index
    %c0_12 = arith.constant 0 : index
    %34 = vector.load %arg4[%c0_11, %c0_12] : memref<8x128xf32, #tpu.memory_space<vmem>>, vector<8x128xf32>
    %35 = vector.shape_cast %33 : vector<64x128xf32> to vector<8x8x128xf32>
    %cst_13 = arith.constant dense<0.000000e+00> : vector<8x128xf32>
    %36 = vector.multi_reduction <add>, %35, %cst_13 [0] : vector<8x8x128xf32> to vector<8x128xf32>
    %37 = arith.addf %34, %36 : vector<8x128xf32>
    %c0_14 = arith.constant 0 : index
    %c0_15 = arith.constant 0 : index
    %38 = vector.load %arg4[%c0_14, %c0_15] : memref<8x128xf32, #tpu.memory_space<vmem>>, vector<8x128xf32>
    tpu.vector_store %arg4[%c0_14, %c0_15], %37 {strides = array<i32>} : memref<8x128xf32, #tpu.memory_space<vmem>>, vector<8x128xf32>,
    %c3_i32 = arith.constant 3 : i32
    %39 = arith.cmpi eq, %arg0, %c3_i32 : i32
    %40 = arith.extui %39 : i1 to i32
    %c0_i32_16 = arith.constant 0 : i32
    %41 = arith.cmpi ne, %40, %c0_i32_16 : i32
    scf.if %41 {
      %c0_17 = arith.constant 0 : index
      %c0_18 = arith.constant 0 : index
      %42 = vector.load %arg4[%c0_17, %c0_18] : memref<8x128xf32, #tpu.memory_space<vmem>>, vector<8x128xf32>
      %43 = vector.shape_cast %42 : vector<8x128xf32> to vector<1x8x128xf32>
      %cst_19 = arith.constant dense<0.000000e+00> : vector<1xf32>
      %44 = vector.multi_reduction <add>, %43, %cst_19 [1, 2] : vector<1x8x128xf32> to vector<1xf32>
      %45 = vector.shape_cast %44 : vector<1xf32> to vector<1x1x1xf32>
      %46 = vector.extract %45[0, 0, 0] : f32 from vector<1x1x1xf32>
      %c0_20 = arith.constant 0 : index
      %c0_21 = arith.constant 0 : index
      %47 = memref.load %arg3[%c0_20, %c0_21] : memref<1x1xf32, #tpu.memory_space<smem>>
      memref.store %46, %arg3[%c0_20, %c0_21] : memref<1x1xf32, #tpu.memory_space<smem>>
    } else {
    }
    return
  }
  func.func @transform_0(%arg0: i32) -> (i32, i32) {
    %c0_i32 = arith.constant 0 : i32
    %c0_i32_0 = arith.constant 0 : i32
    return %arg0, %c0_i32 : i32, i32
  }
  func.func @transform_1(%arg0: i32) -> (i32, i32) {
    %c0_i32 = arith.constant 0 : i32
    %c0_i32_0 = arith.constant 0 : i32
    return %arg0, %c0_i32 : i32, i32
  }
  func.func @transform_2(%arg0: i32) -> (i32, i32) {
    %c0_i32 = arith.constant 0 : i32
    %c0_i32_0 = arith.constant 0 : i32
    %c0_i32_1 = arith.constant 0 : i32
    return %c0_i32, %c0_i32_0 : i32, i32
  }
}

</mosaic_0001>

<llo_original>
// kernel: tpu_custom_call.1
$region0: #{tpu_custom_call.1}
  #allocation0 [shape = 'u32[]', space=smem, size = 0x4, offset = 0x4, fixed_abs, tag = 'smem constant byte address 0x4 - core index']
  #allocation1 [shape = 'u32[72,128]{1,0:T(1,128)}', space=vmem, size = 0x9000, scoped, tag = 'internal scratch']
  #allocation2 [shape = 'f32[8,128]{1,0:T(8,128)}', space=vmem, size = 0x1000, scoped, tag = 'scratch operand']
  %s0 = inlined_call_operand.vmem [shape: f32[200,128], index: 0, kind: input, shape index: {}]
  %s1 = inlined_call_operand.vmem [shape: s32[200,1], index: 1, kind: input, shape index: {}]
  %s2 = inlined_call_operand.hbm [shape: f32[1,1], index: 2, kind: output, shape index: {}]
  %s3 = sld [smem:[#allocation0]]
  $region49: #{tpu_custom_call.1} parent=0
    _
  %s5 = ssub.s32 1, %s3
  %s6 = scalar_select 0, %s5, %s3
  $region1: #{tpu_custom_call.1} parent=0
    #allocation3 [shape = 'u8[512]{0}', space=smem, size = 0x200, scoped, tag = 'output window, operand 0, single buffered']
    #allocation4 [shape = 's32[2]{0}', space=sflag, size = 0x8, scoped, tag = 'scoped memory for tpu_custom_call.1']
    %7 = vsyncpa [#allocation4], 0
    loop: start=0, step=1, limit=6
    $region2: #{tpu_custom_call.1} parent=1 // loop_pre_header
      _
    $region3: #{tpu_custom_call.1} parent=1 // loop_header
      %s9 = sphi 0, %s13
      %p10 = scmp.ge.s32.totalorder %s9, 6
      %s19 = sphi 0, %s21
      %s22 = sphi 0, %s19
      %s23 = sphi 0, %s22
      %s39 = sphi 0, %s23
      %s45 = sphi 0, %s47
      %s48 = sphi 0, %s45
      %s49 = sphi 0, %s48
      %s65 = sphi 0, %s49
      %s69 = sphi 0, %s69
      %s71 = sphi 0, %s69
      %s72 = sphi 0, %s71
      %s86 = sphi 0, %s72
    $region4: #{tpu_custom_call.1} parent=1 // loop_header_branch
      %12 = sbr.rel (%p10) target = $region8
    $region5: #{tpu_custom_call.1} parent=1 // loop_body
      %s14 = ssub.s32 %s9, 1
      %s15 = ssub.s32 %s9, 2
      %s16 = sadd.s32 %s9, 1
      %s17 = ssub.s32 %s9, %s16
      %p18 = scmp.eq.s32.totalorder %s17, 0
      %s20 = sadd.s32 %s19, 1
      %s21 = scalar_select %p18, %s19, %s20
      %p24 = pneg %p18
      %p25 = scmp.eq.s32.totalorder %s9, 3
      %p26 = por %p24, %p25
      %p27 = scmp.ne.s32.totalorder %s19, %s22
      %p28 = scmp.eq.s32.totalorder %s9, 0
      %p29 = por %p27, %p28
      %p30 = scmp.ne.s32.totalorder %s19, %s22
      %p31 = scmp.eq.s32.totalorder %s14, 3
      %p32 = por %p30, %p31
      %p33 = scmp.ne.s32.totalorder %s22, %s23
      %p34 = scmp.eq.s32.totalorder %s14, 0
      %p35 = por %p33, %p34
      %p36 = scmp.ne.s32.totalorder %s22, %s23
      %p37 = scmp.eq.s32.totalorder %s15, 3
      %p38 = por %p36, %p37
      %p40 = scmp.ne.s32.totalorder %s23, %s39
      %p41 = scmp.eq.s32.totalorder %s15, 0
      %p42 = por %p40, %p41
      %s43 = ssub.s32 %s9, %s16
      %p44 = scmp.eq.s32.totalorder %s43, 0
      %s46 = sadd.s32 %s45, 1
      %s47 = scalar_select %p44, %s45, %s46
      %p50 = pneg %p44
      %p51 = scmp.eq.s32.totalorder %s9, 3
      %p52 = por %p50, %p51
      %p53 = scmp.ne.s32.totalorder %s45, %s48
      %p54 = scmp.eq.s32.totalorder %s9, 0
      %p55 = por %p53, %p54
      %p56 = scmp.ne.s32.totalorder %s45, %s48
      %p57 = scmp.eq.s32.totalorder %s14, 3
      %p58 = por %p56, %p57
      %p59 = scmp.ne.s32.totalorder %s48, %s49
      %p60 = scmp.eq.s32.totalorder %s14, 0
      %p61 = por %p59, %p60
      %p62 = scmp.ne.s32.totalorder %s48, %s49
      %p63 = scmp.eq.s32.totalorder %s15, 3
      %p64 = por %p62, %p63
      %p66 = scmp.ne.s32.totalorder %s49, %s65
      %p67 = scmp.eq.s32.totalorder %s15, 0
      %p68 = por %p66, %p67
      %s70 = sadd.s32 %s69, 1
      %p73 = scmp.eq.s32.totalorder %s9, 3
      %p74 = scmp.ne.s32.totalorder %s69, %s71
      %p75 = scmp.eq.s32.totalorder %s9, 0
      %p76 = por %p74, %p75
      %p77 = scmp.ne.s32.totalorder %s69, %s71
      %p78 = scmp.eq.s32.totalorder %s14, 3
      %p79 = por %p77, %p78
      %p80 = scmp.ne.s32.totalorder %s71, %s72
      %p81 = scmp.eq.s32.totalorder %s14, 0
      %p82 = por %p80, %p81
      %p83 = scmp.ne.s32.totalorder %s71, %s72
      %p84 = scmp.eq.s32.totalorder %s15, 3
      %p85 = por %p83, %p84
      %p87 = scmp.ne.s32.totalorder %s72, %s86
      %p88 = scmp.eq.s32.totalorder %s15, 0
      %p89 = por %p87, %p88
      %p90 = scmp.le.s32.totalorder 1, %s9
      %p91 = scmp.lt.s32.totalorder %s9, 5
      %p92 = pnand %p90, %p91
      %p93 = pneg %p92
      // Predicated region
      $region9: #{tpu_custom_call.1} parent=5 // pred_check
        _
      $region10: #{tpu_custom_call.1} parent=5 // pred_check_branch
        %95 = sbr.rel (%p92) target = $region12
      $region11: #{tpu_custom_call.1} parent=5 // pred_region
        %s96 = ssub.s32 %s9, 1
      $region12: #{tpu_custom_call.1} parent=5 // pred_fallthru
        _
      %p97 = scmp.lt.s32.totalorder %s9, 4
      // Predicated region
      $region13: #{tpu_custom_call.1} parent=5 // pred_check
        %p98 = pneg %p97
      $region14: #{tpu_custom_call.1} parent=5 // pred_check_branch
        %100 = sbr.rel (%p98) target = $region16
      $region15: #{tpu_custom_call.1} parent=5 // pred_region
        // Predicated region
        $region17: #{tpu_custom_call.1} parent=15 // pred_check
          %p101 = pneg %p29
        $region18: #{tpu_custom_call.1} parent=15 // pred_check_branch
          %103 = sbr.rel (%p101) target = $region20
        $region19: #{tpu_custom_call.1} parent=15 // pred_region
          %s104 = smul.u32 8, %s9
          %s105 = ssub.s32 25, %s104
          %p106 = scmp.lt.s32.totalorder %s105, 8
          %s107 = scalar_select %p106, %s105, 8
          %s108 = smul.u32 8, %s107
          %p109 = scmp.lt.s32.totalorder %s104, 24
          %s110 = scalar_select %p109, %s104, 24
          %s111 = smul.addr %s110, 8
          %s112 = scalar_lea.vmem %s0, %s111
          %s113 = smul.u32 8, %s9
          %s114 = ssub.s32 25, %s113
          %p115 = scmp.lt.s32.totalorder %s114, 8
          %s116 = scalar_select %p115, %s114, 8
          %s117 = smul.u32 8, %s116
        $region20: #{tpu_custom_call.1} parent=15 // pred_fallthru
          _
        // Predicated region
        $region21: #{tpu_custom_call.1} parent=15 // pred_check
          %p118 = pneg %p55
        $region22: #{tpu_custom_call.1} parent=15 // pred_check_branch
          %120 = sbr.rel (%p118) target = $region24
        $region23: #{tpu_custom_call.1} parent=15 // pred_region
          %s121 = smul.u32 8, %s9
          %s122 = ssub.s32 25, %s121
          %p123 = scmp.lt.s32.totalorder %s122, 8
          %s124 = scalar_select %p123, %s122, 8
          %s125 = smul.u32 8, %s124
          %p126 = scmp.lt.s32.totalorder %s121, 24
          %s127 = scalar_select %p126, %s121, 24
          %s128 = smul.addr %s127, 8
          %s129 = scalar_lea.vmem %s1, %s128
          %s130 = smul.u32 8, %s9
          %s131 = ssub.s32 25, %s130
          %p132 = scmp.lt.s32.totalorder %s131, 8
          %s133 = scalar_select %p132, %s131, 8
          %s134 = smul.u32 8, %s133
        $region24: #{tpu_custom_call.1} parent=15 // pred_fallthru
          _
      $region16: #{tpu_custom_call.1} parent=5 // pred_fallthru
        _
      %p135 = scmp.le.s32.totalorder 1, %s9
      %p136 = scmp.lt.s32.totalorder %s9, 5
      %p137 = pnand %p135, %p136
      %p138 = pneg %p137
      // Predicated region
      $region25: #{tpu_custom_call.1} parent=5 // pred_check
        _
      $region26: #{tpu_custom_call.1} parent=5 // pred_check_branch
        %140 = sbr.rel (%p137) target = $region28
      $region27: #{tpu_custom_call.1} parent=5 // pred_region
        %s141 = ssub.s32 %s9, 1
        %s142 = smul.u32 8, %s14
        %s143 = ssub.s32 25, %s142
        %p144 = scmp.lt.s32.totalorder %s143, 8
        %s145 = scalar_select %p144, %s143, 8
        %s146 = smul.u32 8, %s145
        %p147 = scmp.lt.s32.totalorder %s142, 24
        %s148 = scalar_select %p147, %s142, 24
        %s149 = smul.addr %s148, 8
        %s150 = scalar_lea.vmem %s0, %s149
        %p151 = pneg %p35
        %p152 = pneg %p32
        %s153 = smul.u32 8, %s14
        %s154 = ssub.s32 25, %s153
        %p155 = scmp.lt.s32.totalorder %s154, 8
        %s156 = scalar_select %p155, %s154, 8
        %s157 = smul.u32 8, %s156
        %p158 = scmp.lt.s32.totalorder %s153, 24
        %s159 = scalar_select %p158, %s153, 24
        %s160 = smul.addr %s159, 8
        %s161 = scalar_lea.vmem %s1, %s160
        %p162 = pneg %p61
        %p163 = pneg %p58
        %p164 = pneg %p82
        %p165 = pneg %p79
        %s166 = smul.u32 8, %s14
        %s167 = ssub.s32 25, %s166
        %p168 = scmp.lt.s32.totalorder %s167, 8
        %s169 = scalar_select %p168, %s167, 8
        %s170 = smul.u32 8, %s169
        %p171 = scmp.lt.s32.totalorder %s166, 24
        %s172 = scalar_select %p171, %s166, 24
        %s173 = smul.addr %s172, 8
        %s174 = scalar_lea.vmem %s0, %s173
        %s175 = smul.u32 8, %s14
        %s176 = ssub.s32 25, %s175
        %p177 = scmp.lt.s32.totalorder %s176, 8
        %s178 = scalar_select %p177, %s176, 8
        %s179 = smul.u32 8, %s178
        %s180 = smul.u32 8, %s14
        %s181 = ssub.s32 25, %s180
        %p182 = scmp.lt.s32.totalorder %s181, 8
        %s183 = scalar_select %p182, %s181, 8
        %s184 = smul.u32 8, %s183
        %p185 = scmp.lt.s32.totalorder %s180, 24
        %s186 = scalar_select %p185, %s180, 24
        %s187 = smul.addr %s186, 8
        %s188 = scalar_lea.vmem %s1, %s187
        %s189 = smul.u32 8, %s14
        %s190 = ssub.s32 25, %s189
        %p191 = scmp.lt.s32.totalorder %s190, 8
        %s192 = scalar_select %p191, %s190, 8
        %s193 = smul.u32 8, %s192
        %p194 = scmp.eq.s32.totalorder %s14, 0
        // Predicated region
        $region29: #{tpu_custom_call.1} parent=27 // pred_check
          %p195 = pneg %p194
        $region30: #{tpu_custom_call.1} parent=27 // pred_check_branch
          %197 = sbr.rel (%p195) target = $region32
        $region31: #{tpu_custom_call.1} parent=27 // pred_region
          %198 = vst [vmem:[#allocation2] sm:$0xff] 0.0
        $region32: #{tpu_custom_call.1} parent=27 // pred_fallthru
          _
        %v199 = vld [vmem:[%s174] sm:$0xff]
        %v200 = vld [vmem:[%s174 + $0x8] sm:$0xff]
        %v201 = vld [vmem:[%s174 + $0x10] sm:$0xff]
        %v202 = vld [vmem:[%s174 + $0x18] sm:$0xff]
        %v203 = vld [vmem:[%s174 + $0x20] sm:$0xff]
        %v204 = vld [vmem:[%s174 + $0x28] sm:$0xff]
        %v205 = vld [vmem:[%s174 + $0x30] sm:$0xff]
        %v206 = vld [vmem:[%s174 + $0x38] sm:$0xff]
        %v207 = vld [vmem:[%s188] sm:$0xff]
        %v208 = vld [vmem:[%s188 + $0x8] sm:$0xff]
        %v209 = vld [vmem:[%s188 + $0x10] sm:$0xff]
        %v210 = vld [vmem:[%s188 + $0x18] sm:$0xff]
        %v211 = vld [vmem:[%s188 + $0x20] sm:$0xff]
        %v212 = vld [vmem:[%s188 + $0x28] sm:$0xff]
        %v213 = vld [vmem:[%s188 + $0x30] sm:$0xff]
        %v214 = vld [vmem:[%s188 + $0x38] sm:$0xff]
        %v215 = vlaneseq
        %v216 = vand.u32 %v215, 127
        %s217 = smul.u32 %s14, 64
        %v218 = vlaneseq
        %v219 = vshrl.u32 %v218, 7
        %v220 = vadd.s32 %v219, 8
        %v221 = vadd.s32 %v219, 16
        %v222 = vadd.s32 %v219, 24
        %v223 = vadd.s32 %v219, 32
        %v224 = vadd.s32 %v219, 40
        %v225 = vadd.s32 %v219, 48
        %v226 = vadd.s32 %v219, 56
        %v227 = vstv %s217
        %v228 = vadd.s32 %v227, %v219
        %v229 = vadd.s32 %v227, %v220
        %v230 = vadd.s32 %v227, %v221
        %v231 = vadd.s32 %v227, %v222
        %v232 = vadd.s32 %v227, %v223
        %v233 = vadd.s32 %v227, %v224
        %v234 = vadd.s32 %v227, %v225
        %v235 = vadd.s32 %v227, %v226
        %236 = vset.pattern.permute.xlu0 0
        %237 = vperm.xlu0 %236, %v207
        %v238 = vpop.permute.xlu0 %237
        %239 = vset.pattern.permute.xlu0 0
        %240 = vperm.xlu0 %239, %v208
        %v241 = vpop.permute.xlu0 %240
        %242 = vset.pattern.permute.xlu0 0
        %243 = vperm.xlu0 %242, %v209
        %v244 = vpop.permute.xlu0 %243
        %245 = vset.pattern.permute.xlu0 0
        %246 = vperm.xlu0 %245, %v210
        %v247 = vpop.permute.xlu0 %246
        %248 = vset.pattern.permute.xlu0 0
        %249 = vperm.xlu0 %248, %v211
        %v250 = vpop.permute.xlu0 %249
        %251 = vset.pattern.permute.xlu0 0
        %252 = vperm.xlu0 %251, %v212
        %v253 = vpop.permute.xlu0 %252
        %254 = vset.pattern.permute.xlu0 0
        %255 = vperm.xlu0 %254, %v213
        %v256 = vpop.permute.xlu0 %255
        %257 = vset.pattern.permute.xlu0 0
        %258 = vperm.xlu0 %257, %v214
        %v259 = vpop.permute.xlu0 %258
        %vm260 = vcmp.eq.s32.totalorder %v216, %v238
        %vm261 = vcmp.eq.s32.totalorder %v216, %v241
        %vm262 = vcmp.eq.s32.totalorder %v216, %v244
        %vm263 = vcmp.eq.s32.totalorder %v216, %v247
        %vm264 = vcmp.eq.s32.totalorder %v216, %v250
        %vm265 = vcmp.eq.s32.totalorder %v216, %v253
        %vm266 = vcmp.eq.s32.totalorder %v216, %v256
        %vm267 = vcmp.eq.s32.totalorder %v216, %v259
        %v268 = vsub.f32 -0.105360515, %v199
        %v269 = vsub.f32 -0.105360515, %v200
        %v270 = vsub.f32 -0.105360515, %v201
        %v271 = vsub.f32 -0.105360515, %v202
        %v272 = vsub.f32 -0.105360515, %v203
        %v273 = vsub.f32 -0.105360515, %v204
        %v274 = vsub.f32 -0.105360515, %v205
        %v275 = vsub.f32 -0.105360515, %v206
        %v276 = vmul.f32 %v268, 0.9
        %v277 = vmul.f32 %v269, 0.9
        %v278 = vmul.f32 %v270, 0.9
        %v279 = vmul.f32 %v271, 0.9
        %v280 = vmul.f32 %v272, 0.9
        %v281 = vmul.f32 %v273, 0.9
        %v282 = vmul.f32 %v274, 0.9
        %v283 = vmul.f32 %v275, 0.9
        %v284 = vsub.f32 -7.138867, %v199
        %v285 = vsub.f32 -7.138867, %v200
        %v286 = vsub.f32 -7.138867, %v201
        %v287 = vsub.f32 -7.138867, %v202
        %v288 = vsub.f32 -7.138867, %v203
        %v289 = vsub.f32 -7.138867, %v204
        %v290 = vsub.f32 -7.138867, %v205
        %v291 = vsub.f32 -7.138867, %v206
        %v292 = vmul.f32 %v284, 0.0007936508
        %v293 = vmul.f32 %v285, 0.0007936508
        %v294 = vmul.f32 %v286, 0.0007936508
        %v295 = vmul.f32 %v287, 0.0007936508
        %v296 = vmul.f32 %v288, 0.0007936508
        %v297 = vmul.f32 %v289, 0.0007936508
        %v298 = vmul.f32 %v290, 0.0007936508
        %v299 = vmul.f32 %v291, 0.0007936508
        %v300 = vsel %vm260, %v276, %v292
        %v301 = vsel %vm261, %v277, %v293
        %v302 = vsel %vm262, %v278, %v294
        %v303 = vsel %vm263, %v279, %v295
        %v304 = vsel %vm264, %v280, %v296
        %v305 = vsel %vm265, %v281, %v297
        %v306 = vsel %vm266, %v282, %v298
        %v307 = vsel %vm267, %v283, %v299
        %vm308 = vcmp.eq.s32.totalorder %v216, 0
        %v309 = vsel %vm308, 0.0, %v300
        %v310 = vsel %vm308, 0.0, %v301
        %v311 = vsel %vm308, 0.0, %v302
        %v312 = vsel %vm308, 0.0, %v303
        %v313 = vsel %vm308, 0.0, %v304
        %v314 = vsel %vm308, 0.0, %v305
        %v315 = vsel %vm308, 0.0, %v306
        %v316 = vsel %vm308, 0.0, %v307
        %vm317 = vcmp.ne.s32.totalorder %v207, 0
        %vm318 = vcmp.ne.s32.totalorder %v208, 0
        %vm319 = vcmp.ne.s32.totalorder %v209, 0
        %vm320 = vcmp.ne.s32.totalorder %v210, 0
        %vm321 = vcmp.ne.s32.totalorder %v211, 0
        %vm322 = vcmp.ne.s32.totalorder %v212, 0
        %vm323 = vcmp.ne.s32.totalorder %v213, 0
        %vm324 = vcmp.ne.s32.totalorder %v214, 0
        %vm325 = vcmp.lt.s32.totalorder %v228, 200
        %vm326 = vcmp.lt.s32.totalorder %v229, 200
        %vm327 = vcmp.lt.s32.totalorder %v230, 200
        %vm328 = vcmp.lt.s32.totalorder %v231, 200
        %vm329 = vcmp.lt.s32.totalorder %v232, 200
        %vm330 = vcmp.lt.s32.totalorder %v233, 200
        %vm331 = vcmp.lt.s32.totalorder %v234, 200
        %vm332 = vcmp.lt.s32.totalorder %v235, 200
        %vm333 = vmand %vm317, %vm325
        %vm334 = vmand %vm318, %vm326
        %vm335 = vmand %vm319, %vm327
        %vm336 = vmand %vm320, %vm328
        %vm337 = vmand %vm321, %vm329
        %vm338 = vmand %vm322, %vm330
        %vm339 = vmand %vm323, %vm331
        %vm340 = vmand %vm324, %vm332
        %v341 = vsel %vm333, 1, 0
        %v342 = vsel %vm334, 1, 0
        %v343 = vsel %vm335, 1, 0
        %v344 = vsel %vm336, 1, 0
        %v345 = vsel %vm337, 1, 0
        %v346 = vsel %vm338, 1, 0
        %v347 = vsel %vm339, 1, 0
        %v348 = vsel %vm340, 1, 0
        %349 = vset.pattern.permute.xlu0 0
        %350 = vperm.xlu0 %349, %v341
        %v351 = vpop.permute.xlu0 %350
        %352 = vset.pattern.permute.xlu0 0
        %353 = vperm.xlu0 %352, %v342
        %v354 = vpop.permute.xlu0 %353
        %355 = vset.pattern.permute.xlu0 0
        %356 = vperm.xlu0 %355, %v343
        %v357 = vpop.permute.xlu0 %356
        %358 = vset.pattern.permute.xlu0 0
        %359 = vperm.xlu0 %358, %v344
        %v360 = vpop.permute.xlu0 %359
        %361 = vset.pattern.permute.xlu0 0
        %362 = vperm.xlu0 %361, %v345
        %v363 = vpop.permute.xlu0 %362
        %364 = vset.pattern.permute.xlu0 0
        %365 = vperm.xlu0 %364, %v346
        %v366 = vpop.permute.xlu0 %365
        %367 = vset.pattern.permute.xlu0 0
        %368 = vperm.xlu0 %367, %v347
        %v369 = vpop.permute.xlu0 %368
        %370 = vset.pattern.permute.xlu0 0
        %371 = vperm.xlu0 %370, %v348
        %v372 = vpop.permute.xlu0 %371
        %vm373 = vcmp.eq.s32.totalorder %v351, 1
        %vm374 = vcmp.eq.s32.totalorder %v354, 1
        %vm375 = vcmp.eq.s32.totalorder %v357, 1
        %vm376 = vcmp.eq.s32.totalorder %v360, 1
        %vm377 = vcmp.eq.s32.totalorder %v363, 1
        %vm378 = vcmp.eq.s32.totalorder %v366, 1
        %vm379 = vcmp.eq.s32.totalorder %v369, 1
        %vm380 = vcmp.eq.s32.totalorder %v372, 1
        %v381 = vsel %vm373, %v309, 0.0
        %v382 = vsel %vm374, %v310, 0.0
        %v383 = vsel %vm375, %v311, 0.0
        %v384 = vsel %vm376, %v312, 0.0
        %v385 = vsel %vm377, %v313, 0.0
        %v386 = vsel %vm378, %v314, 0.0
        %v387 = vsel %vm379, %v315, 0.0
        %v388 = vsel %vm380, %v316, 0.0
        %v389 = vld [vmem:[#allocation2] sm:$0xff]
        %v390 = vadd.f32 %v381, %v382
        %v391 = vadd.f32 %v390, %v383
        %v392 = vadd.f32 %v391, %v384
        %v393 = vadd.f32 %v392, %v385
        %v394 = vadd.f32 %v393, %v386
        %v395 = vadd.f32 %v394, %v387
        %v396 = vadd.f32 %v395, %v388
        %v397 = vadd.f32 %v389, %v396
        %398 = vst [vmem:[#allocation2] sm:$0xff] %v397
        %p399 = scmp.eq.s32.totalorder %s14, 3
        // Predicated region
        $region33: #{tpu_custom_call.1} parent=27 // pred_check
          %p400 = pneg %p399
        $region34: #{tpu_custom_call.1} parent=27 // pred_check_branch
          %402 = sbr.rel (%p400) target = $region36
        $region35: #{tpu_custom_call.1} parent=27 // pred_region
          %v403 = vld [vmem:[#allocation2] sm:$0xff]
          %404 = vadd.xlane.f32.xlu0 %v403
          %v405 = vpop.xlane.xlu0 %404
          %v406 = vrot.slane %v405, 4
          %v407 = vadd.f32 %v405, %v406
          %v408 = vrot.slane %v407, 2
          %v409 = vadd.f32 %v407, %v408
          %v410 = vrot.slane %v409, 1
          %v411 = vadd.f32 %v409, %v410
          %s412 = vtos %v411
          %s413 = scalar_lea.smem [#allocation3], 0
          %414 = sst [smem:[%s413]] %s412
        $region36: #{tpu_custom_call.1} parent=27 // pred_fallthru
          _
        // Predicated region
        $region37: #{tpu_custom_call.1} parent=27 // pred_check
          %p415 = pneg %p79
        $region38: #{tpu_custom_call.1} parent=27 // pred_check_branch
          %417 = sbr.rel (%p415) target = $region40
        $region39: #{tpu_custom_call.1} parent=27 // pred_region
          %419 = vsyncadd [#allocation4], 0
          %s421 = sshll.u32 %s2, 4
          %s422 = int_to_ptr.hbm [resolvable:$true] %s421
          %424 = dma.smem_to_hbm [#allocation3], 16, %s422, [#allocation4]
        $region40: #{tpu_custom_call.1} parent=27 // pred_fallthru
          _
        // Predicated region
        $region41: #{tpu_custom_call.1} parent=27 // pred_check
          %p425 = pneg %p79
        $region42: #{tpu_custom_call.1} parent=27 // pred_check_branch
          %427 = sbr.rel (%p425) target = $region44
        $region43: #{tpu_custom_call.1} parent=27 // pred_region
          %429 = dma.done [#allocation4], 16
        $region44: #{tpu_custom_call.1} parent=27 // pred_fallthru
          _
        %430 = sfence
      $region28: #{tpu_custom_call.1} parent=5 // pred_fallthru
        _
      %p431 = scmp.le.s32.totalorder 2, %s9
      // Predicated region
      $region45: #{tpu_custom_call.1} parent=5 // pred_check
        %p432 = pneg %p431
      $region46: #{tpu_custom_call.1} parent=5 // pred_check_branch
        %434 = sbr.rel (%p432) target = $region48
      $region47: #{tpu_custom_call.1} parent=5 // pred_region
        %s435 = ssub.s32 %s9, 2
      $region48: #{tpu_custom_call.1} parent=5 // pred_fallthru
        _
    $region6: #{tpu_custom_call.1} parent=1 // loop_footer
      %s13 = sadd.s32 1, %s9
    $region7: #{tpu_custom_call.1} parent=1 // loop_footer_branch
      %8 = sbr.rel target = $region3
    $region8: #{tpu_custom_call.1} parent=1 // loop_exit
      _
    %436 = vsyncpa [#allocation4], 1
    %s437 = scalar_lea.sflag [#allocation4], 1
    %438 = vsyncpa %s437, 1

</llo_original>
